<compile_context>
chip_gen: v7x
topology: tpu7x:2x2x1
jax: 0.10.0
libtpu: 0.0.40
codegen_flags: <defaults>
</compile_context>

<pallas_src>
import jax
import jax.numpy as jnp
from jax.experimental import pallas as pl
from jax.experimental.pallas import tpu as pltpu


def _e2n_kernel(xr_ref, xc_ref, wr_ref, wc_ref, b_ref, o_ref):
    # xr_ref/xc_ref : (Mb, K)  row-/col-view slabs of x (K = C*D), compute dtype
    # wr_ref/wc_ref : (K, Fp)  reshaped conv weights, F zero-padded to lanes
    # b_ref         : (1, Fp)  combined bias (br + bc), f32
    # o_ref         : (Mb, Fp) lane-dense f32 output slab
    acc = jnp.dot(xr_ref[...], wr_ref[...], preferred_element_type=jnp.float32)
    acc = acc + jnp.dot(xc_ref[...], wc_ref[...],
                        preferred_element_type=jnp.float32)
    o_ref[...] = (acc + b_ref[...]).astype(o_ref.dtype)


def edge2node(x, wr, wc, br, bc, *, compute_dtype=jnp.bfloat16):
    """Pallas Edge2Node forward.

    Args:
        x  : (N, C, D, D) float32, NCHW like PyTorch.
        wr : (F, C, 1, D) row_conv weight.
        wc : (F, C, D, 1) col_conv weight.
        br : (F,) row_conv bias.
        bc : (F,) col_conv bias.
        compute_dtype: dtype of the matmul operands (bf16 default for
            v5e/v6e/v7x MXU + DMA savings; use jnp.float32 for exact
            PyTorch-f32 numerics).  Accumulation / epilogue is always f32.
    Returns:
        (N, F, D, 1) float32, same semantics as the PyTorch module.
    """
    N, C, D, _ = x.shape
    F = wr.shape[0]
    K = C * D
    Fp = pl.cdiv(F, 128) * 128                 # lane-dense output width

    # ---- layout plumbing, done ONCE in the wrapper (no concat copy) --------
    # x_row[n*D + i, c*D + j] = x[n, c, i, j]   (row-conv view)
    # x_col[n*D + i, c*D + k] = x[n, c, k, i]   (col-conv view)
    x_row = jnp.transpose(x, (0, 2, 1, 3)).reshape(N * D, K)
    x_col = jnp.transpose(x, (0, 3, 1, 2)).reshape(N * D, K)

    wr2 = jnp.pad(wr.reshape(F, K).T, ((0, 0), (0, Fp - F)))      # (K, Fp)
    wc2 = jnp.pad(wc.reshape(F, K).T, ((0, 0), (0, Fp - F)))      # (K, Fp)
    bias = jnp.pad(br + bc, (0, Fp - F)).reshape(1, Fp).astype(jnp.float32)

    x_row = x_row.astype(compute_dtype)
    x_col = x_col.astype(compute_dtype)
    wr2 = wr2.astype(compute_dtype)
    wc2 = wc2.astype(compute_dtype)

    # ---- blocking: flat row space, big blocks, no forced multi-step --------
    M = N * D
    if M <= 1024:
        Mb = -(-M // 8) * 8                     # round up to sublane multiple
    else:
        Mb = 1024
    n_steps = pl.cdiv(M, Mb)
    Mp = n_steps * Mb
    if Mp != M:                                 # zero rows, sliced off below
        x_row = jnp.pad(x_row, ((0, Mp - M), (0, 0)))
        x_col = jnp.pad(x_col, ((0, Mp - M), (0, 0)))

    itemsize = jnp.dtype(compute_dtype).itemsize
    cost = pl.CostEstimate(
        flops=2 * 2 * M * K * F,                # row + col matmuls
        transcendentals=0,
        bytes_accessed=(2 * Mp * K + 2 * K * Fp) * itemsize
        + Fp * 4 + Mp * Fp * 4,
    )

    # VMEM estimate (double-buffered inputs/outputs); raise the scoped limit
    # only when the tiles actually need it (v7x: 32 MiB scoped / 64 MiB phys).
    vmem_est = (2 * 2 * Mb * K * itemsize       # x_row / x_col blocks
                + 2 * 2 * K * Fp * itemsize     # resident weights (conservative)
                + 2 * Fp * 4                    # bias
                + 2 * Mb * Fp * 4)              # output block
    cp_kwargs = dict(dimension_semantics=("parallel",))
    if vmem_est > 16 * 1024 * 1024:
        cp_kwargs["vmem_limit_bytes"] = int(min(2 * vmem_est, 64 * 1024 * 1024))

    out2d = pl.pallas_call(
        _e2n_kernel,
        out_shape=jax.ShapeDtypeStruct((Mp, Fp), jnp.float32),
        grid_spec=pltpu.PrefetchScalarGridSpec(
            num_scalar_prefetch=0,
            grid=(n_steps,),
            in_specs=[
                pl.BlockSpec((Mb, K), lambda i: (i, 0)),
                pl.BlockSpec((Mb, K), lambda i: (i, 0)),
                pl.BlockSpec((K, Fp), lambda i: (0, 0)),   # weight resident
                pl.BlockSpec((K, Fp), lambda i: (0, 0)),   # weight resident
                pl.BlockSpec((1, Fp), lambda i: (0, 0)),   # bias resident
            ],
            out_specs=pl.BlockSpec((Mb, Fp), lambda i: (i, 0)),
        ),
        compiler_params=pltpu.CompilerParams(**cp_kwargs),
        cost_estimate=cost,
    )(x_row, x_col, wr2, wc2, bias)

    # (Mp, Fp) -> (N, D, F) -> (N, F, D, 1) to match PyTorch exactly.
    # NOTE: consumers that accept (N, D, F) can take `out` directly and skip
    # the transpose below (saves one output-sized HBM round trip).
    out = out2d[:M, :F].reshape(N, D, F)
    return jnp.transpose(out, (0, 2, 1))[..., None]


def _reference(x, wr, wc, br, bc):
    """Pure-JAX f32 reference of the PyTorch forward."""
    row = jnp.einsum('ncij,fcj->nfi', x, wr[:, :, 0, :]) + br[None, :, None]
    col = jnp.einsum('ncki,fck->nfi', x, wc[:, :, :, 0]) + bc[None, :, None]
    return (row + col)[..., None]


if __name__ == "__main__":
    # Small shapes consistent with the module: batch=2, channel=4, dim=16, filters=32
    N, C, D, F = 2, 4, 16, 32
    key = jax.random.PRNGKey(0)
    kx, kwr, kwc, kbr, kbc = jax.random.split(key, 5)

    x = jax.random.normal(kx, (N, C, D, D), dtype=jnp.float32)
    # Deterministic synthetic parameters (PyTorch Conv2d shapes).
    wr = jax.random.normal(kwr, (F, C, 1, D), dtype=jnp.float32) * 0.1
    wc = jax.random.normal(kwc, (F, C, D, 1), dtype=jnp.float32) * 0.1
    br = jax.random.normal(kbr, (F,), dtype=jnp.float32) * 0.01
    bc = jax.random.normal(kbc, (F,), dtype=jnp.float32) * 0.01

    ref = _reference(x, wr, wc, br, bc)

    # Exact-numerics path (f32 operands) — bit-for-bit module semantics.
    out_f32 = jax.block_until_ready(
        edge2node(x, wr, wc, br, bc, compute_dtype=jnp.float32))
    assert out_f32.shape == (N, F, D, 1), out_f32.shape
    assert jnp.allclose(out_f32, ref, atol=1e-4, rtol=1e-4), \
        float(jnp.max(jnp.abs(out_f32 - ref)))

    # Fast path (bf16 operands, f32 accumulation) — default; looser tolerance.
    out_bf16 = jax.block_until_ready(edge2node(x, wr, wc, br, bc))
    assert out_bf16.shape == (N, F, D, 1), out_bf16.shape
    assert jnp.allclose(out_bf16, ref, atol=6e-2, rtol=6e-2), \
        float(jnp.max(jnp.abs(out_bf16 - ref)))

    print("KERNEL_OK")
</pallas_src>

<mosaic_0001>
module attributes {stable_mosaic.version = 11 : i64} {
  func.func @_e2n_kernel(%arg0: i32, %arg1: memref<32x64xf32, #tpu.memory_space<vmem>>, %arg2: memref<32x64xf32, #tpu.memory_space<vmem>>, %arg3: memref<64x128xf32, #tpu.memory_space<vmem>>, %arg4: memref<64x128xf32, #tpu.memory_space<vmem>>, %arg5: memref<1x128xf32, #tpu.memory_space<vmem>>, %arg6: memref<32x128xf32, #tpu.memory_space<vmem>>) attributes {dimension_semantics = [#tpu.dimension_semantics<parallel>], iteration_bounds = array<i64: 1>, scalar_prefetch = 0 : i64, scratch_operands = 0 : i64, tpu.core_type = #tpu.core_type<tc>, window_params = [{transform_indices = @transform_0, window_bounds = array<i64: 32, 64>}, {transform_indices = @transform_1, window_bounds = array<i64: 32, 64>}, {pipeline_mode = #tpu.pipeline_mode<synchronous>, transform_indices = @transform_2, window_bounds = array<i64: 64, 128>}, {pipeline_mode = #tpu.pipeline_mode<synchronous>, transform_indices = @transform_3, window_bounds = array<i64: 64, 128>}, {pipeline_mode = #tpu.pipeline_mode<synchronous>, transform_indices = @transform_4, window_bounds = array<i64: 1, 128>}, {transform_indices = @transform_5, window_bounds = array<i64: 32, 128>}]} {
    %c0 = arith.constant 0 : index
    %c0_0 = arith.constant 0 : index
    %0 = vector.load %arg1[%c0, %c0_0] : memref<32x64xf32, #tpu.memory_space<vmem>>, vector<32x64xf32>
    %c0_1 = arith.constant 0 : index
    %c0_2 = arith.constant 0 : index
    %1 = vector.load %arg3[%c0_1, %c0_2] : memref<64x128xf32, #tpu.memory_space<vmem>>, vector<64x128xf32>
    %cst = arith.constant dense<0.000000e+00> : vector<32x128xf32>
    %2 = tpu.matmul %0, %1, %cst {dimension_numbers = #tpu.dot_dimension_numbers<[1], [0], [0], [1], [0, 0, 1, 1], [], []>} : vector<32x64xf32>, vector<64x128xf32>, vector<32x128xf32> -> vector<32x128xf32>
    %c0_3 = arith.constant 0 : index
    %c0_4 = arith.constant 0 : index
    %3 = vector.load %arg2[%c0_3, %c0_4] : memref<32x64xf32, #tpu.memory_space<vmem>>, vector<32x64xf32>
    %c0_5 = arith.constant 0 : index
    %c0_6 = arith.constant 0 : index
    %4 = vector.load %arg4[%c0_5, %c0_6] : memref<64x128xf32, #tpu.memory_space<vmem>>, vector<64x128xf32>
    %cst_7 = arith.constant dense<0.000000e+00> : vector<32x128xf32>
    %5 = tpu.matmul %3, %4, %cst_7 {dimension_numbers = #tpu.dot_dimension_numbers<[1], [0], [0], [1], [0, 0, 1, 1], [], []>} : vector<32x64xf32>, vector<64x128xf32>, vector<32x128xf32> -> vector<32x128xf32>
    %6 = arith.addf %2, %5 : vector<32x128xf32>
    %c0_8 = arith.constant 0 : index
    %c0_9 = arith.constant 0 : index
    %7 = vector.load %arg5[%c0_8, %c0_9] : memref<1x128xf32, #tpu.memory_space<vmem>>, vector<1x128xf32>
    %8 = vector.broadcast %7 : vector<1x128xf32> to vector<32x128xf32>
    %9 = arith.addf %6, %8 : vector<32x128xf32>
    %c0_10 = arith.constant 0 : index
    %c0_11 = arith.constant 0 : index
    %10 = vector.load %arg6[%c0_10, %c0_11] : memref<32x128xf32, #tpu.memory_space<vmem>>, vector<32x128xf32>
    tpu.vector_store %arg6[%c0_10, %c0_11], %9 {strides = array<i32>} : memref<32x128xf32, #tpu.memory_space<vmem>>, vector<32x128xf32>,
    return
  }
  func.func @transform_0(%arg0: i32) -> (i32, i32) {
    %c0_i32 = arith.constant 0 : i32
    %c0_i32_0 = arith.constant 0 : i32
    return %arg0, %c0_i32 : i32, i32
  }
  func.func @transform_1(%arg0: i32) -> (i32, i32) {
    %c0_i32 = arith.constant 0 : i32
    %c0_i32_0 = arith.constant 0 : i32
    return %arg0, %c0_i32 : i32, i32
  }
  func.func @transform_2(%arg0: i32) -> (i32, i32) {
    %c0_i32 = arith.constant 0 : i32
    %c0_i32_0 = arith.constant 0 : i32
    %c0_i32_1 = arith.constant 0 : i32
    return %c0_i32, %c0_i32_0 : i32, i32
  }
  func.func @transform_3(%arg0: i32) -> (i32, i32) {
    %c0_i32 = arith.constant 0 : i32
    %c0_i32_0 = arith.constant 0 : i32
    %c0_i32_1 = arith.constant 0 : i32
    return %c0_i32, %c0_i32_0 : i32, i32
  }
  func.func @transform_4(%arg0: i32) -> (i32, i32) {
    %c0_i32 = arith.constant 0 : i32
    %c0_i32_0 = arith.constant 0 : i32
    %c0_i32_1 = arith.constant 0 : i32
    return %c0_i32, %c0_i32_0 : i32, i32
  }
  func.func @transform_5(%arg0: i32) -> (i32, i32) {
    %c0_i32 = arith.constant 0 : i32
    %c0_i32_0 = arith.constant 0 : i32
    return %arg0, %c0_i32 : i32, i32
  }
}

</mosaic_0001>

<llo_original>
// kernel: tpu_custom_call.1
$region0: #{tpu_custom_call.1}
  #allocation0 [shape = 'u32[]', space=smem, size = 0x4, offset = 0x4, fixed_abs, tag = 'smem constant byte address 0x4 - core index']
  #allocation1 [shape = 'u32[144,128]{1,0:T(1,128)}', space=vmem, size = 0x12000, scoped, tag = 'internal scratch']
  %s0 = inlined_call_operand.hbm [shape: f32[32,64], index: 0, kind: input, shape index: {}]
  %s1 = inlined_call_operand.hbm [shape: f32[32,64], index: 1, kind: input, shape index: {}]
  %s2 = inlined_call_operand.hbm [shape: f32[64,128], index: 2, kind: input, shape index: {}]
  %s3 = inlined_call_operand.hbm [shape: f32[64,128], index: 3, kind: input, shape index: {}]
  %s4 = inlined_call_operand.vmem [shape: f32[1,128], index: 4, kind: input, shape index: {}]
  %s5 = inlined_call_operand.hbm [shape: f32[32,128], index: 5, kind: output, shape index: {}]
  %s6 = sld [smem:[#allocation0]]
  $region46: #{tpu_custom_call.1} parent=0
    _
  %s8 = ssub.s32 1, %s6
  %s9 = scalar_select 0, %s8, %s6
  $region1: #{tpu_custom_call.1} parent=0
    #allocation2 [shape = 'u8[16384]{0}', space=vmem, size = 0x4000, scoped, tag = 'input window, operand 0, single buffered']
    #allocation3 [shape = 's32[1]{0}', space=sflag, size = 0x4, scoped, tag = 'scoped memory for tpu_custom_call.1']
    #allocation4 [shape = 's32[1]{0}', space=sflag, size = 0x4, scoped, tag = 'scoped memory for tpu_custom_call.1']
    #allocation5 [shape = 'u8[16384]{0}', space=vmem, size = 0x4000, scoped, tag = 'input window, operand 1, single buffered']
    #allocation6 [shape = 's32[1]{0}', space=sflag, size = 0x4, scoped, tag = 'scoped memory for tpu_custom_call.1']
    #allocation7 [shape = 'u8[32768]{0}', space=vmem, size = 0x8000, scoped, tag = 'input window, operand 2, single buffered']
    #allocation8 [shape = 'u8[32768]{0}', space=vmem, size = 0x8000, scoped, tag = 'input window, operand 3, single buffered']
    #allocation9 [shape = 's32[1]{0}', space=sflag, size = 0x4, scoped, tag = 'scoped memory for tpu_custom_call.1']
    #allocation10 [shape = 'u8[16384]{0}', space=vmem, size = 0x4000, scoped, tag = 'output window, operand 0, single buffered']
    %10 = vsyncpa [#allocation3], 0
    %11 = vsyncpa [#allocation6], 0
    %12 = vsyncpa [#allocation9], 0
    %13 = vsyncpa [#allocation4], 0
    // Predicated region
    $region2: #{tpu_custom_call.1} parent=1 // pred_check
      _
    $region3: #{tpu_custom_call.1} parent=1 // pred_check_branch
      %15 = sbr.rel (0) target = $region5
    $region4: #{tpu_custom_call.1} parent=1 // pred_region
      %s17 = ssub.s32 512, 512
      %18 = vsyncadd [#allocation3], %s17
      %s19 = sshll.u32 [#allocation2], 4
      %s20 = int_to_ptr.vmem [resolvable:$true] %s19
      %25 = dma.hbm_to_vmem [thread:$0]  %s0, 512, %s20, [#allocation3], 128, 128, 8
    $region5: #{tpu_custom_call.1} parent=1 // pred_fallthru
      _
    // Predicated region
    $region6: #{tpu_custom_call.1} parent=1 // pred_check
      _
    $region7: #{tpu_custom_call.1} parent=1 // pred_check_branch
      %27 = sbr.rel (0) target = $region9
    $region8: #{tpu_custom_call.1} parent=1 // pred_region
      %s29 = ssub.s32 512, 512
      %30 = vsyncadd [#allocation6], %s29
      %s31 = sshll.u32 [#allocation5], 4
      %s32 = int_to_ptr.vmem [resolvable:$true] %s31
      %37 = dma.hbm_to_vmem [thread:$0]  %s1, 512, %s32, [#allocation6], 128, 128, 8
    $region9: #{tpu_custom_call.1} parent=1 // pred_fallthru
      _
    // Predicated region
    $region10: #{tpu_custom_call.1} parent=1 // pred_check
      _
    $region11: #{tpu_custom_call.1} parent=1 // pred_check_branch
      %39 = sbr.rel (0) target = $region13
    $region12: #{tpu_custom_call.1} parent=1 // pred_region
      %s41 = ssub.s32 1024, 1024
      %42 = vsyncadd [#allocation6], %s41
      %s43 = sshll.u32 [#allocation7], 4
      %s44 = int_to_ptr.vmem [resolvable:$true] %s43
      %49 = dma.hbm_to_vmem [thread:$0]  %s2, 1024, %s44, [#allocation6], 128, 128, 8
    $region13: #{tpu_custom_call.1} parent=1 // pred_fallthru
      _
    // Predicated region
    $region14: #{tpu_custom_call.1} parent=1 // pred_check
      _
    $region15: #{tpu_custom_call.1} parent=1 // pred_check_branch
      %51 = sbr.rel (0) target = $region17
    $region16: #{tpu_custom_call.1} parent=1 // pred_region
      %s53 = ssub.s32 1024, 1024
      %54 = vsyncadd [#allocation9], %s53
      %s55 = sshll.u32 [#allocation8], 4
      %s56 = int_to_ptr.vmem [resolvable:$true] %s55
      %61 = dma.hbm_to_vmem [thread:$0]  %s3, 1024, %s56, [#allocation9], 128, 128, 8
    $region17: #{tpu_custom_call.1} parent=1 // pred_fallthru
      _
    // Predicated region
    $region18: #{tpu_custom_call.1} parent=1 // pred_check
      _
    $region19: #{tpu_custom_call.1} parent=1 // pred_check_branch
      %63 = sbr.rel (0) target = $region21
    $region20: #{tpu_custom_call.1} parent=1 // pred_region
      _
    $region21: #{tpu_custom_call.1} parent=1 // pred_fallthru
      _
    // Predicated region
    $region22: #{tpu_custom_call.1} parent=1 // pred_check
      _
    $region23: #{tpu_custom_call.1} parent=1 // pred_check_branch
      %65 = sbr.rel (0) target = $region25
    $region24: #{tpu_custom_call.1} parent=1 // pred_region
      %66 = dma.done [#allocation3], 512
    $region25: #{tpu_custom_call.1} parent=1 // pred_fallthru
      _
    // Predicated region
    $region26: #{tpu_custom_call.1} parent=1 // pred_check
      _
    $region27: #{tpu_custom_call.1} parent=1 // pred_check_branch
      %68 = sbr.rel (0) target = $region29
    $region28: #{tpu_custom_call.1} parent=1 // pred_region
      %69 = dma.done [#allocation6], 512
    $region29: #{tpu_custom_call.1} parent=1 // pred_fallthru
      _
    // Predicated region
    $region30: #{tpu_custom_call.1} parent=1 // pred_check
      _
    $region31: #{tpu_custom_call.1} parent=1 // pred_check_branch
      %71 = sbr.rel (0) target = $region33
    $region32: #{tpu_custom_call.1} parent=1 // pred_region
      %72 = dma.done [#allocation6], 1024
    $region33: #{tpu_custom_call.1} parent=1 // pred_fallthru
      _
    // Predicated region
    $region34: #{tpu_custom_call.1} parent=1 // pred_check
      _
    $region35: #{tpu_custom_call.1} parent=1 // pred_check_branch
      %74 = sbr.rel (0) target = $region37
    $region36: #{tpu_custom_call.1} parent=1 // pred_region
      %75 = dma.done [#allocation9], 1024
    $region37: #{tpu_custom_call.1} parent=1 // pred_fallthru
      _
    %v76 = vld [vmem:[#allocation2] sm:$0xff]
    %v77 = vld [vmem:[#allocation2 + $0x8] sm:$0xff]
    %v78 = vld [vmem:[#allocation2 + $0x10] sm:$0xff]
    %v79 = vld [vmem:[#allocation2 + $0x18] sm:$0xff]
    %v80 = vld [vmem:[#allocation7] sm:$0xff]
    %v81 = vld [vmem:[#allocation7 + $0x8] sm:$0xff]
    %v82 = vld [vmem:[#allocation7 + $0x10] sm:$0xff]
    %v83 = vld [vmem:[#allocation7 + $0x18] sm:$0xff]
    %v84 = vld [vmem:[#allocation7 + $0x20] sm:$0xff]
    %v85 = vld [vmem:[#allocation7 + $0x28] sm:$0xff]
    %v86 = vld [vmem:[#allocation7 + $0x30] sm:$0xff]
    %v87 = vld [vmem:[#allocation7 + $0x38] sm:$0xff]
    %v88 = vld [vmem:[#allocation5] sm:$0xff]
    %v89 = vld [vmem:[#allocation5 + $0x8] sm:$0xff]
    %v90 = vld [vmem:[#allocation5 + $0x10] sm:$0xff]
    %v91 = vld [vmem:[#allocation5 + $0x18] sm:$0xff]
    %v92 = vld [vmem:[#allocation8] sm:$0xff]
    %v93 = vld [vmem:[#allocation8 + $0x8] sm:$0xff]
    %v94 = vld [vmem:[#allocation8 + $0x10] sm:$0xff]
    %v95 = vld [vmem:[#allocation8 + $0x18] sm:$0xff]
    %v96 = vld [vmem:[#allocation8 + $0x20] sm:$0xff]
    %v97 = vld [vmem:[#allocation8 + $0x28] sm:$0xff]
    %v98 = vld [vmem:[#allocation8 + $0x30] sm:$0xff]
    %v99 = vld [vmem:[#allocation8 + $0x38] sm:$0xff]
    %vm100 = vcmask 523264
    %v102 = vsel %vm100, %v88, 0
    %v105 = vsel %vm100, %v89, 0
    %v108 = vsel %vm100, %v90, 0
    %v111 = vsel %vm100, %v91, 0
    %113 = vmatprep.subr.mxu0 0.0
    %114 = vmatpush1.msra.mxu0 %v92
    %115 = vmatprep.subr.mxu0 0.0
    %116 = vmatpush1.msra.mxu0 %v93
    %117 = vmatprep.subr.mxu0 0.0
    %118 = vmatpush1.msra.mxu0 %v94
    %119 = vmatprep.subr.mxu0 0.0
    %120 = vmatpush1.msra.mxu0 %v95
    %121 = vmatprep.subr.mxu0 0.0
    %122 = vmatpush1.msra.mxu0 %v96
    %123 = vmatprep.subr.mxu0 0.0
    %124 = vmatpush1.msra.mxu0 %v97
    %125 = vmatprep.subr.mxu0 0.0
    %126 = vmatpush1.msra.mxu0 %v98
    %127 = vmatprep.subr.mxu0 0.0
    %128 = vmatpush1.msra.mxu0 %v99
    %129 = vmatprep.subr.mxu0 0.0
    %130 = vmatpush1.msra.mxu0 0.0
    %131 = vmatprep.subr.mxu0 0.0
    %132 = vmatpush1.msra.mxu0 0.0
    %133 = vmatprep.subr.mxu0 0.0
    %134 = vmatpush1.msra.mxu0 0.0
    %135 = vmatprep.subr.mxu0 0.0
    %136 = vmatpush1.msra.mxu0 0.0
    %137 = vmatprep.subr.mxu0 0.0
    %138 = vmatpush1.msra.mxu0 0.0
    %139 = vmatprep.subr.mxu0 0.0
    %140 = vmatpush1.msra.mxu0 0.0
    %141 = vmatprep.subr.mxu0 0.0
    %142 = vmatpush1.msra.mxu0 0.0
    %143 = vmatprep.subr.mxu0 0.0
    %144 = vmatpush1.msra.mxu0 0.0
    %145 = vmatprep.subr.mxu0 0.0
    %146 = vmatpush1.msra.mxu0 0.0
    %147 = vmatprep.subr.mxu0 0.0
    %148 = vmatpush1.msra.mxu0 0.0
    %149 = vmatprep.subr.mxu0 0.0
    %150 = vmatpush1.msra.mxu0 0.0
    %151 = vmatprep.subr.mxu0 0.0
    %152 = vmatpush1.msra.mxu0 0.0
    %153 = vmatprep.subr.mxu0 0.0
    %154 = vmatpush1.msra.mxu0 0.0
    %155 = vmatprep.subr.mxu0 0.0
    %156 = vmatpush1.msra.mxu0 0.0
    %157 = vmatprep.subr.mxu0 0.0
    %158 = vmatpush1.msra.mxu0 0.0
    %159 = vmatprep.subr.mxu0 0.0
    %160 = vmatpush1.msra.mxu0 0.0
    %161 = vmatprep.subr.mxu0 0.0
    %162 = vmatpush1.msra.mxu0 0.0
    %163 = vmatprep.subr.mxu0 0.0
    %164 = vmatpush1.msra.mxu0 0.0
    %165 = vmatprep.subr.mxu0 0.0
    %166 = vmatpush1.msra.mxu0 0.0
    %167 = vmatprep.subr.mxu0 0.0
    %168 = vmatpush1.msra.mxu0 0.0
    %169 = vmatprep.subr.mxu0 0.0
    %170 = vmatpush1.msra.mxu0 0.0
    %171 = vmatprep.subr.mxu0 0.0
    %172 = vmatpush1.msra.mxu0 0.0
    %173 = vmatprep.subr.mxu0 0.0
    %174 = vmatpush1.msra.mxu0 0.0
    %175 = vmatprep.subr.mxu0 0.0
    %176 = vmatpush1.msra.mxu0 0.0
    %177 = vmatprep.mubr.f32.mxu0 0.0
    %178 = vmatmul.mubr.f32.gmra.mrb[0].mxu0 %v102
    %v179 = vpop.f32.mrb[0].mxu0
    %v180 = vadd.f32 0.0, %v179
    %v181 = vpop.f32.mrb[0].mxu0
    %182 = vmatprep.mubr.f32.mxu0 0.0
    %183 = vmatmul.mubr.f32.gmra.mrb[0].mxu0 %v105
    %v184 = vpop.f32.mrb[0].mxu0
    %v185 = vadd.f32 0.0, %v184
    %v186 = vpop.f32.mrb[0].mxu0
    %187 = vmatprep.mubr.f32.mxu0 0.0
    %188 = vmatmul.mubr.f32.gmra.mrb[0].mxu0 %v108
    %v189 = vpop.f32.mrb[0].mxu0
    %v190 = vadd.f32 0.0, %v189
    %v191 = vpop.f32.mrb[0].mxu0
    %192 = vmatprep.mubr.f32.mxu0 0.0
    %193 = vmatmul.mubr.f32.gmra.mrb[0].mxu0 %v111
    %v194 = vpop.f32.mrb[0].mxu0
    %v195 = vadd.f32 0.0, %v194
    %v196 = vpop.f32.mrb[0].mxu0
    %197 = vdwg.mxu0
    %v199 = vsel %vm100, %v76, 0
    %v202 = vsel %vm100, %v77, 0
    %v205 = vsel %vm100, %v78, 0
    %v208 = vsel %vm100, %v79, 0
    %210 = vmatprep.subr.mxu0 0.0
    %211 = vmatpush1.msra.mxu0 %v80
    %212 = vmatprep.subr.mxu0 0.0
    %213 = vmatpush1.msra.mxu0 %v81
    %214 = vmatprep.subr.mxu0 0.0
    %215 = vmatpush1.msra.mxu0 %v82
    %216 = vmatprep.subr.mxu0 0.0
    %217 = vmatpush1.msra.mxu0 %v83
    %218 = vmatprep.subr.mxu0 0.0
    %219 = vmatpush1.msra.mxu0 %v84
    %220 = vmatprep.subr.mxu0 0.0
    %221 = vmatpush1.msra.mxu0 %v85
    %222 = vmatprep.subr.mxu0 0.0
    %223 = vmatpush1.msra.mxu0 %v86
    %224 = vmatprep.subr.mxu0 0.0
    %225 = vmatpush1.msra.mxu0 %v87
    %226 = vmatprep.subr.mxu0 0.0
    %227 = vmatpush1.msra.mxu0 0.0
    %228 = vmatprep.subr.mxu0 0.0
    %229 = vmatpush1.msra.mxu0 0.0
    %230 = vmatprep.subr.mxu0 0.0
    %231 = vmatpush1.msra.mxu0 0.0
    %232 = vmatprep.subr.mxu0 0.0
    %233 = vmatpush1.msra.mxu0 0.0
    %234 = vmatprep.subr.mxu0 0.0
    %235 = vmatpush1.msra.mxu0 0.0
    %236 = vmatprep.subr.mxu0 0.0
    %237 = vmatpush1.msra.mxu0 0.0
    %238 = vmatprep.subr.mxu0 0.0
    %239 = vmatpush1.msra.mxu0 0.0
    %240 = vmatprep.subr.mxu0 0.0
    %241 = vmatpush1.msra.mxu0 0.0
    %242 = vmatprep.subr.mxu0 0.0
    %243 = vmatpush1.msra.mxu0 0.0
    %244 = vmatprep.subr.mxu0 0.0
    %245 = vmatpush1.msra.mxu0 0.0
    %246 = vmatprep.subr.mxu0 0.0
    %247 = vmatpush1.msra.mxu0 0.0
    %248 = vmatprep.subr.mxu0 0.0
    %249 = vmatpush1.msra.mxu0 0.0
    %250 = vmatprep.subr.mxu0 0.0
    %251 = vmatpush1.msra.mxu0 0.0
    %252 = vmatprep.subr.mxu0 0.0
    %253 = vmatpush1.msra.mxu0 0.0
    %254 = vmatprep.subr.mxu0 0.0
    %255 = vmatpush1.msra.mxu0 0.0
    %256 = vmatprep.subr.mxu0 0.0
    %257 = vmatpush1.msra.mxu0 0.0
    %258 = vmatprep.subr.mxu0 0.0
    %259 = vmatpush1.msra.mxu0 0.0
    %260 = vmatprep.subr.mxu0 0.0
    %261 = vmatpush1.msra.mxu0 0.0
    %262 = vmatprep.subr.mxu0 0.0
    %263 = vmatpush1.msra.mxu0 0.0
    %264 = vmatprep.subr.mxu0 0.0
    %265 = vmatpush1.msra.mxu0 0.0
    %266 = vmatprep.subr.mxu0 0.0
    %267 = vmatpush1.msra.mxu0 0.0
    %268 = vmatprep.subr.mxu0 0.0
    %269 = vmatpush1.msra.mxu0 0.0
    %270 = vmatprep.subr.mxu0 0.0
    %271 = vmatpush1.msra.mxu0 0.0
    %272 = vmatprep.subr.mxu0 0.0
    %273 = vmatpush1.msra.mxu0 0.0
    %274 = vmatprep.mubr.f32.mxu0 0.0
    %275 = vmatmul.mubr.f32.gmra.mrb[0].mxu0 %v199
    %v276 = vpop.f32.mrb[0].mxu0
    %v277 = vadd.f32 %v180, %v276
    %v278 = vpop.f32.mrb[0].mxu0
    %279 = vmatprep.mubr.f32.mxu0 0.0
    %280 = vmatmul.mubr.f32.gmra.mrb[0].mxu0 %v202
    %v281 = vpop.f32.mrb[0].mxu0
    %v282 = vadd.f32 %v185, %v281
    %v283 = vpop.f32.mrb[0].mxu0
    %284 = vmatprep.mubr.f32.mxu0 0.0
    %285 = vmatmul.mubr.f32.gmra.mrb[0].mxu0 %v205
    %v286 = vpop.f32.mrb[0].mxu0
    %v287 = vadd.f32 %v190, %v286
    %v288 = vpop.f32.mrb[0].mxu0
    %289 = vmatprep.mubr.f32.mxu0 0.0
    %290 = vmatmul.mubr.f32.gmra.mrb[0].mxu0 %v208
    %v291 = vpop.f32.mrb[0].mxu0
    %v292 = vadd.f32 %v195, %v291
    %v293 = vpop.f32.mrb[0].mxu0
    %294 = vdwg.mxu0
    %v295 = vld [vmem:[%s4] sm:$0x1]
    %v297 = vlaneseq
    %v298 = vshrl.u32 %v297, 7
    %v299 = vsub.s32 0, %v298
    %v300 = vrot.slane %v295, %v299
    %v302 = vadd.f32 %v277, %v300
    %v303 = vadd.f32 %v282, %v300
    %v304 = vadd.f32 %v287, %v300
    %v305 = vadd.f32 %v292, %v300
    %306 = vst [vmem:[#allocation10] sm:$0xff] %v302
    %307 = vst [vmem:[#allocation10 + $0x8] sm:$0xff] %v303
    %308 = vst [vmem:[#allocation10 + $0x10] sm:$0xff] %v304
    %309 = vst [vmem:[#allocation10 + $0x18] sm:$0xff] %v305
    // Predicated region
    $region38: #{tpu_custom_call.1} parent=1 // pred_check
      _
    $region39: #{tpu_custom_call.1} parent=1 // pred_check_branch
      %311 = sbr.rel (0) target = $region41
    $region40: #{tpu_custom_call.1} parent=1 // pred_region
      %s313 = ssub.s32 512, 512
      %314 = vsyncadd [#allocation4], %s313
      %s315 = sshll.u32 [#allocation10], 4
      %s316 = int_to_ptr.vmem [resolvable:$true] %s315
      %321 = dma.vmem_to_hbm [thread:$0]  %s316, 512, %s5, [#allocation4], 128, 128, 8
    $region41: #{tpu_custom_call.1} parent=1 // pred_fallthru
      _
    // Predicated region
    $region42: #{tpu_custom_call.1} parent=1 // pred_check
      _
    $region43: #{tpu_custom_call.1} parent=1 // pred_check_branch
      %323 = sbr.rel (0) target = $region45
    $region44: #{tpu_custom_call.1} parent=1 // pred_region
      %324 = dma.done [#allocation4], 512
    $region45: #{tpu_custom_call.1} parent=1 // pred_fallthru
      _
    %325 = vsyncpa [#allocation3], 1
    %326 = vsyncpa [#allocation6], 1
    %327 = vsyncpa [#allocation9], 1
    %328 = vsyncpa [#allocation4], 1

</llo_original>
